<compile_context>
chip_gen: v7x
topology: tpu7x:2x2x1
jax: 0.10.0
libtpu: 0.0.40
codegen_flags: <defaults>
</compile_context>

<pallas_src>
import jax
import jax.numpy as jnp
from jax.experimental import pallas as pl
from jax.experimental.pallas import tpu as pltpu


def combiner_kernel(z_ref, h_rnn_ref, w_zh_ref, b_zh_ref,
                    w_hls_ref, b_hls_ref, out_ref):
    # (tb, z_dim) @ (z_dim, rnn_dim) on the MXU, f32 accumulation.
    zh = jnp.dot(z_ref[...], w_zh_ref[...],
                 preferred_element_type=jnp.float32) + b_zh_ref[...]

    # 0.5*(tanh(zh) + h_rnn) as two fused multiply-adds (tanh -> EUP slot).
    h_combined = 0.5 * jnp.tanh(zh) + 0.5 * h_rnn_ref[...]

    # Fused loc/scale projection: single matmul against [W_hl | W_hs].
    fused = jnp.dot(h_combined.astype(w_hls_ref.dtype), w_hls_ref[...],
                    preferred_element_type=jnp.float32) + b_hls_ref[...]

    # First z_dim lanes are loc (identity), last z_dim lanes are scale (exp).
    z_dim = out_ref.shape[-1] // 2
    col = jax.lax.broadcasted_iota(jnp.int32, fused.shape, 1)
    out_ref[...] = jnp.where(col < z_dim, fused, jnp.exp(fused)).astype(out_ref.dtype)


def combiner_forward(z_t_1, h_rnn, params, *,
                     matmul_dtype=jnp.bfloat16, batch_tile=256):
    """z_t_1: (B, z_dim), h_rnn: (B, rnn_dim) -> (loc, scale), both (B, z_dim) f32.

    B may be batch, or batch*timesteps flattened (amortizes dispatch over a grid).
    """
    B, z_dim = z_t_1.shape
    rnn_dim = h_rnn.shape[1]
    w_zh, b_zh, w_hl, b_hl, w_hs, b_hs = params

    # ---- host-side (one-time) prep -----------------------------------------
    # Fuse the two hidden->out projections and cast matmul operands.
    w_hls = jnp.concatenate([w_hl, w_hs], axis=1).astype(matmul_dtype)   # (rnn, 2z)
    b_hls = jnp.concatenate([b_hl, b_hs]).reshape(1, 2 * z_dim).astype(jnp.float32)
    w_zh_m = w_zh.astype(matmul_dtype)                                   # (z, rnn)
    b_zh2 = b_zh.reshape(1, rnn_dim).astype(jnp.float32)
    z_m = z_t_1.astype(matmul_dtype)
    h_f32 = h_rnn.astype(jnp.float32)

    # ---- batch tiling -------------------------------------------------------
    if B <= batch_tile:
        tb, Bp = B, B                      # single tile == full array (always legal)
    else:
        assert batch_tile % 8 == 0, "batch_tile must be a multiple of 8"
        tb = batch_tile
        Bp = -(-B // tb) * tb
        pad = Bp - B
        if pad:
            z_m = jnp.pad(z_m, ((0, pad), (0, 0)))
            h_f32 = jnp.pad(h_f32, ((0, pad), (0, 0)))

    grid = (Bp // tb,)

    out = pl.pallas_call(
        combiner_kernel,
        out_shape=jax.ShapeDtypeStruct((Bp, 2 * z_dim), jnp.float32),
        grid=grid,
        in_specs=[
            pl.BlockSpec((tb, z_dim), lambda i: (i, 0)),          # z_{t-1}
            pl.BlockSpec((tb, rnn_dim), lambda i: (i, 0)),        # h_rnn
            pl.BlockSpec((z_dim, rnn_dim), lambda i: (0, 0)),     # W_zh (resident)
            pl.BlockSpec((1, rnn_dim), lambda i: (0, 0)),         # b_zh
            pl.BlockSpec((rnn_dim, 2 * z_dim), lambda i: (0, 0)), # [W_hl | W_hs]
            pl.BlockSpec((1, 2 * z_dim), lambda i: (0, 0)),       # [b_hl | b_hs]
        ],
        out_specs=pl.BlockSpec((tb, 2 * z_dim), lambda i: (i, 0)),
        compiler_params=pltpu.CompilerParams(
            dimension_semantics=("parallel",)),   # shards across TCs on v7x
    )(z_m, h_f32, w_zh_m, b_zh2, w_hls, b_hls)

    loc = out[:B, :z_dim]
    scale = out[:B, z_dim:]
    return loc, scale


def init_combiner_params(key, z_dim, rnn_dim):
    """nn.Linear-style init (U[-1/sqrt(fan_in), 1/sqrt(fan_in)]).
    Weights stored pre-transposed: (in_features, out_features)."""
    ks = jax.random.split(key, 6)

    def lin(kw, kb, fan_in, fan_out):
        bound = 1.0 / jnp.sqrt(fan_in)
        w = jax.random.uniform(kw, (fan_in, fan_out), jnp.float32, -bound, bound)
        b = jax.random.uniform(kb, (fan_out,), jnp.float32, -bound, bound)
        return w, b

    w_zh, b_zh = lin(ks[0], ks[1], z_dim, rnn_dim)   # lin_z_to_hidden
    w_hl, b_hl = lin(ks[2], ks[3], rnn_dim, z_dim)   # lin_hidden_to_loc
    w_hs, b_hs = lin(ks[4], ks[5], rnn_dim, z_dim)   # lin_hidden_to_scale
    return (w_zh, b_zh, w_hl, b_hl, w_hs, b_hs)


def combiner_reference(z_t_1, h_rnn, params, matmul_dtype=jnp.float32):
    """Pure-JAX reference; matmul_dtype lets us mirror the kernel's precision."""
    w_zh, b_zh, w_hl, b_hl, w_hs, b_hs = params
    md = matmul_dtype
    zh = jnp.dot(z_t_1.astype(md), w_zh.astype(md),
                 preferred_element_type=jnp.float32) + b_zh
    h_combined = 0.5 * (jnp.tanh(zh) + h_rnn)
    loc = jnp.dot(h_combined.astype(md), w_hl.astype(md),
                  preferred_element_type=jnp.float32) + b_hl
    scale = jnp.exp(jnp.dot(h_combined.astype(md), w_hs.astype(md),
                            preferred_element_type=jnp.float32) + b_hs)
    return loc, scale


if __name__ == "__main__":
    B, z_dim, rnn_dim = 8, 16, 32

    key = jax.random.PRNGKey(0)
    k_z, k_h, k_p = jax.random.split(key, 3)
    z_t_1 = jax.random.normal(k_z, (B, z_dim), jnp.float32)
    h_rnn = jax.random.normal(k_h, (B, rnn_dim), jnp.float32)
    params = init_combiner_params(k_p, z_dim, rnn_dim)

    # Default (bf16 matmul inputs, f32 accumulate + f32 elementwise) path.
    loc, scale = combiner_forward(z_t_1, h_rnn, params)
    jax.block_until_ready((loc, scale))
    assert loc.shape == (B, z_dim) and scale.shape == (B, z_dim)
    assert bool(jnp.all(scale > 0))

    # Matches a mixed-precision reference tightly...
    loc_mp, scale_mp = combiner_reference(z_t_1, h_rnn, params, jnp.bfloat16)
    assert jnp.allclose(loc, loc_mp, atol=2e-2, rtol=2e-2)
    assert jnp.allclose(scale, scale_mp, atol=2e-2, rtol=2e-2)
    # ...and the full-f32 module semantics within bf16-input tolerance.
    loc_f32, scale_f32 = combiner_reference(z_t_1, h_rnn, params, jnp.float32)
    assert jnp.allclose(loc, loc_f32, atol=6e-2, rtol=6e-2)
    assert jnp.allclose(scale, scale_f32, atol=6e-2, rtol=6e-2)

    # Pure-f32 kernel path matches the module exactly.
    loc32, scale32 = combiner_forward(z_t_1, h_rnn, params, matmul_dtype=jnp.float32)
    jax.block_until_ready((loc32, scale32))
    assert jnp.allclose(loc32, loc_f32, atol=1e-5, rtol=1e-5)
    assert jnp.allclose(scale32, scale_f32, atol=1e-5, rtol=1e-5)

    # Larger "batch of timesteps" case exercising the batch grid + padding.
    B2 = 40
    k_z2, k_h2 = jax.random.split(jax.random.PRNGKey(1), 2)
    z2 = jax.random.normal(k_z2, (B2, z_dim), jnp.float32)
    h2 = jax.random.normal(k_h2, (B2, rnn_dim), jnp.float32)
    loc2, scale2 = combiner_forward(z2, h2, params, batch_tile=16)  # grid=(3,)
    jax.block_until_ready((loc2, scale2))
    loc2_ref, scale2_ref = combiner_reference(z2, h2, params, jnp.float32)
    assert loc2.shape == (B2, z_dim) and scale2.shape == (B2, z_dim)
    assert jnp.allclose(loc2, loc2_ref, atol=6e-2, rtol=6e-2)
    assert jnp.allclose(scale2, scale2_ref, atol=6e-2, rtol=6e-2)
    assert bool(jnp.all(scale2 > 0))

    print("KERNEL_OK")
</pallas_src>

<mosaic_0001>
module attributes {stable_mosaic.version = 11 : i64} {
  func.func @combiner_kernel(%arg0: i32, %arg1: memref<8x16xbf16, #tpu.memory_space<vmem>>, %arg2: memref<8x32xf32, #tpu.memory_space<vmem>>, %arg3: memref<16x32xbf16, #tpu.memory_space<vmem>>, %arg4: memref<1x32xf32, #tpu.memory_space<vmem>>, %arg5: memref<32x32xbf16, #tpu.memory_space<vmem>>, %arg6: memref<1x32xf32, #tpu.memory_space<vmem>>, %arg7: memref<8x32xf32, #tpu.memory_space<vmem>>) attributes {dimension_semantics = [#tpu.dimension_semantics<parallel>], iteration_bounds = array<i64: 1>, scalar_prefetch = 0 : i64, scratch_operands = 0 : i64, tpu.core_type = #tpu.core_type<tc>, window_params = [{transform_indices = @transform_0, window_bounds = array<i64: 8, 16>}, {transform_indices = @transform_1, window_bounds = array<i64: 8, 32>}, {pipeline_mode = #tpu.pipeline_mode<synchronous>, transform_indices = @transform_2, window_bounds = array<i64: 16, 32>}, {pipeline_mode = #tpu.pipeline_mode<synchronous>, transform_indices = @transform_3, window_bounds = array<i64: 1, 32>}, {pipeline_mode = #tpu.pipeline_mode<synchronous>, transform_indices = @transform_4, window_bounds = array<i64: 32, 32>}, {pipeline_mode = #tpu.pipeline_mode<synchronous>, transform_indices = @transform_5, window_bounds = array<i64: 1, 32>}, {transform_indices = @transform_6, window_bounds = array<i64: 8, 32>}]} {
    %c0 = arith.constant 0 : index
    %c0_0 = arith.constant 0 : index
    %0 = vector.load %arg1[%c0, %c0_0] : memref<8x16xbf16, #tpu.memory_space<vmem>>, vector<8x16xbf16>
    %c0_1 = arith.constant 0 : index
    %c0_2 = arith.constant 0 : index
    %1 = vector.load %arg3[%c0_1, %c0_2] : memref<16x32xbf16, #tpu.memory_space<vmem>>, vector<16x32xbf16>
    %cst = arith.constant dense<0.000000e+00> : vector<8x32xf32>
    %2 = tpu.matmul %0, %1, %cst {dimension_numbers = #tpu.dot_dimension_numbers<[1], [0], [0], [1], [0, 0, 1, 1], [], []>} : vector<8x16xbf16>, vector<16x32xbf16>, vector<8x32xf32> -> vector<8x32xf32>
    %c0_3 = arith.constant 0 : index
    %c0_4 = arith.constant 0 : index
    %3 = vector.load %arg4[%c0_3, %c0_4] : memref<1x32xf32, #tpu.memory_space<vmem>>, vector<1x32xf32>
    %4 = vector.broadcast %3 : vector<1x32xf32> to vector<8x32xf32>
    %5 = arith.addf %2, %4 : vector<8x32xf32>
    %6 = math.tanh %5 : vector<8x32xf32>
    %cst_5 = arith.constant 5.000000e-01 : f32
    %7 = vector.broadcast %cst_5 : f32 to vector<8x32xf32>
    %8 = arith.mulf %7, %6 : vector<8x32xf32>
    %c0_6 = arith.constant 0 : index
    %c0_7 = arith.constant 0 : index
    %9 = vector.load %arg2[%c0_6, %c0_7] : memref<8x32xf32, #tpu.memory_space<vmem>>, vector<8x32xf32>
    %cst_8 = arith.constant 5.000000e-01 : f32
    %10 = vector.broadcast %cst_8 : f32 to vector<8x32xf32>
    %11 = arith.mulf %10, %9 : vector<8x32xf32>
    %12 = arith.addf %8, %11 : vector<8x32xf32>
    %13 = arith.truncf %12 : vector<8x32xf32> to vector<8x32xbf16>
    %c0_9 = arith.constant 0 : index
    %c0_10 = arith.constant 0 : index
    %14 = vector.load %arg5[%c0_9, %c0_10] : memref<32x32xbf16, #tpu.memory_space<vmem>>, vector<32x32xbf16>
    %cst_11 = arith.constant dense<0.000000e+00> : vector<8x32xf32>
    %15 = tpu.matmul %13, %14, %cst_11 {dimension_numbers = #tpu.dot_dimension_numbers<[1], [0], [0], [1], [0, 0, 1, 1], [], []>} : vector<8x32xbf16>, vector<32x32xbf16>, vector<8x32xf32> -> vector<8x32xf32>
    %c0_12 = arith.constant 0 : index
    %c0_13 = arith.constant 0 : index
    %16 = vector.load %arg6[%c0_12, %c0_13] : memref<1x32xf32, #tpu.memory_space<vmem>>, vector<1x32xf32>
    %17 = vector.broadcast %16 : vector<1x32xf32> to vector<8x32xf32>
    %18 = arith.addf %15, %17 : vector<8x32xf32>
    %19 = tpu.iota {dimensions = array<i32: 1>} : vector<8x32xi32>
    %c16_i32 = arith.constant 16 : i32
    %20 = vector.broadcast %c16_i32 : i32 to vector<8x32xi32>
    %21 = arith.cmpi slt, %19, %20 : vector<8x32xi32>
    %22 = math.exp %18 : vector<8x32xf32>
    %23 = arith.select %21, %18, %22 : vector<8x32xi1>, vector<8x32xf32>
    %c0_14 = arith.constant 0 : index
    %c0_15 = arith.constant 0 : index
    %24 = vector.load %arg7[%c0_14, %c0_15] : memref<8x32xf32, #tpu.memory_space<vmem>>, vector<8x32xf32>
    tpu.vector_store %arg7[%c0_14, %c0_15], %23 {strides = array<i32>} : memref<8x32xf32, #tpu.memory_space<vmem>>, vector<8x32xf32>,
    return
  }
  func.func @transform_0(%arg0: i32) -> (i32, i32) {
    %c0_i32 = arith.constant 0 : i32
    %c0_i32_0 = arith.constant 0 : i32
    return %arg0, %c0_i32 : i32, i32
  }
  func.func @transform_1(%arg0: i32) -> (i32, i32) {
    %c0_i32 = arith.constant 0 : i32
    %c0_i32_0 = arith.constant 0 : i32
    return %arg0, %c0_i32 : i32, i32
  }
  func.func @transform_2(%arg0: i32) -> (i32, i32) {
    %c0_i32 = arith.constant 0 : i32
    %c0_i32_0 = arith.constant 0 : i32
    %c0_i32_1 = arith.constant 0 : i32
    return %c0_i32, %c0_i32_0 : i32, i32
  }
  func.func @transform_3(%arg0: i32) -> (i32, i32) {
    %c0_i32 = arith.constant 0 : i32
    %c0_i32_0 = arith.constant 0 : i32
    %c0_i32_1 = arith.constant 0 : i32
    return %c0_i32, %c0_i32_0 : i32, i32
  }
  func.func @transform_4(%arg0: i32) -> (i32, i32) {
    %c0_i32 = arith.constant 0 : i32
    %c0_i32_0 = arith.constant 0 : i32
    %c0_i32_1 = arith.constant 0 : i32
    return %c0_i32, %c0_i32_0 : i32, i32
  }
  func.func @transform_5(%arg0: i32) -> (i32, i32) {
    %c0_i32 = arith.constant 0 : i32
    %c0_i32_0 = arith.constant 0 : i32
    %c0_i32_1 = arith.constant 0 : i32
    return %c0_i32, %c0_i32_0 : i32, i32
  }
  func.func @transform_6(%arg0: i32) -> (i32, i32) {
    %c0_i32 = arith.constant 0 : i32
    %c0_i32_0 = arith.constant 0 : i32
    return %arg0, %c0_i32 : i32, i32
  }
}

</mosaic_0001>

<llo_original>
// kernel: tpu_custom_call.1
$region0: #{tpu_custom_call.1}
  #allocation0 [shape = 'u32[]', space=smem, size = 0x4, offset = 0x4, fixed_abs, tag = 'smem constant byte address 0x4 - core index']
  #allocation1 [shape = 'u32[144,128]{1,0:T(1,128)}', space=vmem, size = 0x12000, scoped, tag = 'internal scratch']
  %s0 = inlined_call_operand.hbm [shape: bf16[8,16], index: 0, kind: input, shape index: {}]
  %s1 = inlined_call_operand.hbm [shape: f32[8,32], index: 1, kind: input, shape index: {}]
  %s2 = inlined_call_operand.hbm [shape: bf16[16,32], index: 2, kind: input, shape index: {}]
  %s3 = inlined_call_operand.vmem [shape: f32[1,32], index: 3, kind: input, shape index: {}]
  %s4 = inlined_call_operand.hbm [shape: bf16[32,32], index: 4, kind: input, shape index: {}]
  %s5 = inlined_call_operand.vmem [shape: f32[1,32], index: 5, kind: input, shape index: {}]
  %s6 = inlined_call_operand.hbm [shape: f32[8,32], index: 6, kind: output, shape index: {}]
  %s7 = sld [smem:[#allocation0]]
  $region50: #{tpu_custom_call.1} parent=0
    _
  %s9 = ssub.s32 1, %s7
  %s10 = scalar_select 0, %s9, %s7
  $region1: #{tpu_custom_call.1} parent=0
    #allocation2 [shape = 'u8[2048]{0}', space=vmem, size = 0x800, scoped, tag = 'input window, operand 0, single buffered']
    #allocation3 [shape = 's32[1]{0}', space=sflag, size = 0x4, scoped, tag = 'scoped memory for tpu_custom_call.1']
    #allocation4 [shape = 's32[1]{0}', space=sflag, size = 0x4, scoped, tag = 'scoped memory for tpu_custom_call.1']
    #allocation5 [shape = 'u8[4096]{0}', space=vmem, size = 0x1000, scoped, tag = 'input window, operand 1, single buffered']
    #allocation6 [shape = 's32[1]{0}', space=sflag, size = 0x4, scoped, tag = 'scoped memory for tpu_custom_call.1']
    #allocation7 [shape = 'u8[4096]{0}', space=vmem, size = 0x1000, scoped, tag = 'input window, operand 2, single buffered']
    #allocation8 [shape = 'u8[8192]{0}', space=vmem, size = 0x2000, scoped, tag = 'input window, operand 4, single buffered']
    #allocation9 [shape = 's32[1]{0}', space=sflag, size = 0x4, scoped, tag = 'scoped memory for tpu_custom_call.1']
    #allocation10 [shape = 'u8[4096]{0}', space=vmem, size = 0x1000, scoped, tag = 'output window, operand 0, single buffered']
    %11 = vsyncpa [#allocation3], 0
    %12 = vsyncpa [#allocation6], 0
    %13 = vsyncpa [#allocation9], 0
    %14 = vsyncpa [#allocation4], 0
    // Predicated region
    $region2: #{tpu_custom_call.1} parent=1 // pred_check
      _
    $region3: #{tpu_custom_call.1} parent=1 // pred_check_branch
      %16 = sbr.rel (0) target = $region5
    $region4: #{tpu_custom_call.1} parent=1 // pred_region
      %s18 = ssub.s32 64, 64
      %19 = vsyncadd [#allocation3], %s18
      %s21 = sshll.u32 [#allocation2], 4
      %s22 = int_to_ptr.vmem [resolvable:$true] %s21
      %24 = dma.hbm_to_vmem [thread:$0]  %s0, 64, %s22, [#allocation3]
    $region5: #{tpu_custom_call.1} parent=1 // pred_fallthru
      _
    // Predicated region
    $region6: #{tpu_custom_call.1} parent=1 // pred_check
      _
    $region7: #{tpu_custom_call.1} parent=1 // pred_check_branch
      %26 = sbr.rel (0) target = $region9
    $region8: #{tpu_custom_call.1} parent=1 // pred_region
      %s28 = ssub.s32 128, 128
      %29 = vsyncadd [#allocation6], %s28
      %s31 = sshll.u32 [#allocation5], 4
      %s32 = int_to_ptr.vmem [resolvable:$true] %s31
      %34 = dma.hbm_to_vmem [thread:$0]  %s1, 128, %s32, [#allocation6]
    $region9: #{tpu_custom_call.1} parent=1 // pred_fallthru
      _
    // Predicated region
    $region10: #{tpu_custom_call.1} parent=1 // pred_check
      _
    $region11: #{tpu_custom_call.1} parent=1 // pred_check_branch
      %36 = sbr.rel (0) target = $region13
    $region12: #{tpu_custom_call.1} parent=1 // pred_region
      %s38 = ssub.s32 128, 128
      %39 = vsyncadd [#allocation6], %s38
      %s40 = sshll.u32 [#allocation7], 4
      %s41 = int_to_ptr.vmem [resolvable:$true] %s40
      %46 = dma.hbm_to_vmem [thread:$0]  %s2, 128, %s41, [#allocation6], 64, 64, 4
    $region13: #{tpu_custom_call.1} parent=1 // pred_fallthru
      _
    // Predicated region
    $region14: #{tpu_custom_call.1} parent=1 // pred_check
      _
    $region15: #{tpu_custom_call.1} parent=1 // pred_check_branch
      %48 = sbr.rel (0) target = $region17
    $region16: #{tpu_custom_call.1} parent=1 // pred_region
      _
    $region17: #{tpu_custom_call.1} parent=1 // pred_fallthru
      _
    // Predicated region
    $region18: #{tpu_custom_call.1} parent=1 // pred_check
      _
    $region19: #{tpu_custom_call.1} parent=1 // pred_check_branch
      %50 = sbr.rel (0) target = $region21
    $region20: #{tpu_custom_call.1} parent=1 // pred_region
      %s52 = ssub.s32 256, 256
      %53 = vsyncadd [#allocation9], %s52
      %s54 = sshll.u32 [#allocation8], 4
      %s55 = int_to_ptr.vmem [resolvable:$true] %s54
      %60 = dma.hbm_to_vmem [thread:$0]  %s4, 256, %s55, [#allocation9], 64, 64, 4
    $region21: #{tpu_custom_call.1} parent=1 // pred_fallthru
      _
    // Predicated region
    $region22: #{tpu_custom_call.1} parent=1 // pred_check
      _
    $region23: #{tpu_custom_call.1} parent=1 // pred_check_branch
      %62 = sbr.rel (0) target = $region25
    $region24: #{tpu_custom_call.1} parent=1 // pred_region
      _
    $region25: #{tpu_custom_call.1} parent=1 // pred_fallthru
      _
    // Predicated region
    $region26: #{tpu_custom_call.1} parent=1 // pred_check
      _
    $region27: #{tpu_custom_call.1} parent=1 // pred_check_branch
      %64 = sbr.rel (0) target = $region29
    $region28: #{tpu_custom_call.1} parent=1 // pred_region
      %65 = dma.done [#allocation3], 64
    $region29: #{tpu_custom_call.1} parent=1 // pred_fallthru
      _
    // Predicated region
    $region30: #{tpu_custom_call.1} parent=1 // pred_check
      _
    $region31: #{tpu_custom_call.1} parent=1 // pred_check_branch
      %67 = sbr.rel (0) target = $region33
    $region32: #{tpu_custom_call.1} parent=1 // pred_region
      %68 = dma.done [#allocation6], 128
    $region33: #{tpu_custom_call.1} parent=1 // pred_fallthru
      _
    // Predicated region
    $region34: #{tpu_custom_call.1} parent=1 // pred_check
      _
    $region35: #{tpu_custom_call.1} parent=1 // pred_check_branch
      %70 = sbr.rel (0) target = $region37
    $region36: #{tpu_custom_call.1} parent=1 // pred_region
      %71 = dma.done [#allocation6], 128
    $region37: #{tpu_custom_call.1} parent=1 // pred_fallthru
      _
    // Predicated region
    $region38: #{tpu_custom_call.1} parent=1 // pred_check
      _
    $region39: #{tpu_custom_call.1} parent=1 // pred_check_branch
      %73 = sbr.rel (0) target = $region41
    $region40: #{tpu_custom_call.1} parent=1 // pred_region
      %74 = dma.done [#allocation9], 256
    $region41: #{tpu_custom_call.1} parent=1 // pred_fallthru
      _
    %v76 = vld [vmem:[#allocation2] sm:$0xf]
    %v77 = vld [vmem:[#allocation7] sm:$0xf]
    %v78 = vld [vmem:[#allocation7 + $0x4] sm:$0xf]
    %v79 = vld [vmem:[%s3] sm:$0x1]
    %v81 = vlaneseq
    %v82 = vshrl.u32 %v81, 7
    %v83 = vsub.s32 0, %v82
    %v84 = vrot.slane %v79, %v83
    %v88 = vunpack.c.l.b16 %v77
    %v89 = vunpack.c.l.b16 %v78
    %v90 = vpack.c.b16 %v89, %v88
    %vm92 = vcmask 130048
    %v94 = vsel %vm92, %v76, 0
    %96 = vmatprep.subr.bf16.mxu0 0
    %97 = vmatpush1.bf16.msra.mxu0 %v90
    %98 = vmatprep.subr.bf16.mxu0 0
    %99 = vmatpush1.bf16.msra.mxu0 0
    %100 = vmatprep.subr.bf16.mxu0 0
    %101 = vmatpush1.bf16.msra.mxu0 0
    %102 = vmatprep.subr.bf16.mxu0 0
    %103 = vmatpush1.bf16.msra.mxu0 0
    %104 = vmatprep.subr.bf16.mxu0 0
    %105 = vmatpush1.bf16.msra.mxu0 0
    %106 = vmatprep.subr.bf16.mxu0 0
    %107 = vmatpush1.bf16.msra.mxu0 0
    %108 = vmatprep.subr.bf16.mxu0 0
    %109 = vmatpush1.bf16.msra.mxu0 0
    %110 = vmatprep.subr.bf16.mxu0 0
    %111 = vmatpush1.bf16.msra.mxu0 0
    %112 = vmatprep.subr.bf16.mxu0 0
    %113 = vmatpush1.bf16.msra.mxu0 0
    %114 = vmatprep.subr.bf16.mxu0 0
    %115 = vmatpush1.bf16.msra.mxu0 0
    %116 = vmatprep.subr.bf16.mxu0 0
    %117 = vmatpush1.bf16.msra.mxu0 0
    %118 = vmatprep.subr.bf16.mxu0 0
    %119 = vmatpush1.bf16.msra.mxu0 0
    %120 = vmatprep.subr.bf16.mxu0 0
    %121 = vmatpush1.bf16.msra.mxu0 0
    %122 = vmatprep.subr.bf16.mxu0 0
    %123 = vmatpush1.bf16.msra.mxu0 0
    %124 = vmatprep.subr.bf16.mxu0 0
    %125 = vmatpush1.bf16.msra.mxu0 0
    %126 = vmatprep.subr.bf16.mxu0 0
    %127 = vmatpush1.bf16.msra.mxu0 0
    %128 = vmatprep.mubr.bf16.mxu0 0
    %129 = vmatmul.mubr.bf16.gmra.mrb[0].mxu0 %v94
    %v130 = vpop.f32.mrb[0].mxu0
    %v131 = vadd.f32 %v84, %v130
    %v132 = vpop.f32.mrb[0].mxu0
    %v133 = vpop.f32.mrb[0].mxu0
    %v134 = vpop.f32.mrb[0].mxu0
    %135 = vdwg.mxu0
    %v136 = vtanh.pop %v131
    %v137 = vmul.f32 %v136, 0.5
    %v138 = vld [vmem:[#allocation5] sm:$0xff]
    %v139 = vmul.f32 %v138, 0.5
    %v140 = vadd.f32 %v137, %v139
    %v141 = vpack.c.bf16 %v140, %v140
    %v142 = vld [vmem:[#allocation8] sm:$0xf]
    %v143 = vld [vmem:[#allocation8 + $0x4] sm:$0xf]
    %v144 = vld [vmem:[#allocation8 + $0x8] sm:$0xf]
    %v145 = vld [vmem:[#allocation8 + $0xc] sm:$0xf]
    %v146 = vld [vmem:[%s5] sm:$0x1]
    %v148 = vlaneseq
    %v149 = vshrl.u32 %v148, 7
    %v150 = vsub.s32 0, %v149
    %v151 = vrot.slane %v146, %v150
    %v157 = vunpack.c.l.b16 %v142
    %v158 = vunpack.c.l.b16 %v143
    %v159 = vunpack.c.l.b16 %v144
    %v160 = vunpack.c.l.b16 %v145
    %v161 = vpack.c.b16 %v158, %v157
    %v162 = vpack.c.b16 %v160, %v159
    %vm165 = vcmask 261120
    %v167 = vsel %vm165, %v141, 0
    %169 = vmatprep.subr.bf16.mxu0 0
    %170 = vmatpush1.bf16.msra.mxu0 %v161
    %171 = vmatprep.subr.bf16.mxu0 0
    %172 = vmatpush1.bf16.msra.mxu0 %v162
    %173 = vmatprep.subr.bf16.mxu0 0
    %174 = vmatpush1.bf16.msra.mxu0 0
    %175 = vmatprep.subr.bf16.mxu0 0
    %176 = vmatpush1.bf16.msra.mxu0 0
    %177 = vmatprep.subr.bf16.mxu0 0
    %178 = vmatpush1.bf16.msra.mxu0 0
    %179 = vmatprep.subr.bf16.mxu0 0
    %180 = vmatpush1.bf16.msra.mxu0 0
    %181 = vmatprep.subr.bf16.mxu0 0
    %182 = vmatpush1.bf16.msra.mxu0 0
    %183 = vmatprep.subr.bf16.mxu0 0
    %184 = vmatpush1.bf16.msra.mxu0 0
    %185 = vmatprep.subr.bf16.mxu0 0
    %186 = vmatpush1.bf16.msra.mxu0 0
    %187 = vmatprep.subr.bf16.mxu0 0
    %188 = vmatpush1.bf16.msra.mxu0 0
    %189 = vmatprep.subr.bf16.mxu0 0
    %190 = vmatpush1.bf16.msra.mxu0 0
    %191 = vmatprep.subr.bf16.mxu0 0
    %192 = vmatpush1.bf16.msra.mxu0 0
    %193 = vmatprep.subr.bf16.mxu0 0
    %194 = vmatpush1.bf16.msra.mxu0 0
    %195 = vmatprep.subr.bf16.mxu0 0
    %196 = vmatpush1.bf16.msra.mxu0 0
    %197 = vmatprep.subr.bf16.mxu0 0
    %198 = vmatpush1.bf16.msra.mxu0 0
    %199 = vmatprep.subr.bf16.mxu0 0
    %200 = vmatpush1.bf16.msra.mxu0 0
    %201 = vmatprep.mubr.bf16.mxu0 0
    %202 = vmatmul.mubr.bf16.gmra.mrb[0].mxu0 %v167
    %v203 = vpop.f32.mrb[0].mxu0
    %v204 = vadd.f32 %v151, %v203
    %v205 = vpop.f32.mrb[0].mxu0
    %v206 = vpop.f32.mrb[0].mxu0
    %v207 = vpop.f32.mrb[0].mxu0
    %208 = vdwg.mxu0
    %v209 = vlaneseq
    %v210 = vand.u32 %v209, 127
    %vm211 = vcmp.lt.s32.totalorder %v210, 16
    %v212 = vmul.f32 %v204, 1.442695
    %v213 = vpow.pop %v212
    %v214 = vsel %vm211, %v204, %v213
    %215 = vst.msk [vmem:[#allocation10] sm:$0xff] %vm165, %v214
    // Predicated region
    $region42: #{tpu_custom_call.1} parent=1 // pred_check
      _
    $region43: #{tpu_custom_call.1} parent=1 // pred_check_branch
      %217 = sbr.rel (0) target = $region45
    $region44: #{tpu_custom_call.1} parent=1 // pred_region
      %s219 = ssub.s32 128, 128
      %220 = vsyncadd [#allocation4], %s219
      %s222 = sshll.u32 [#allocation10], 4
      %s223 = int_to_ptr.vmem [resolvable:$true] %s222
      %225 = dma.vmem_to_hbm [thread:$0]  %s223, 128, %s6, [#allocation4]
    $region45: #{tpu_custom_call.1} parent=1 // pred_fallthru
      _
    // Predicated region
    $region46: #{tpu_custom_call.1} parent=1 // pred_check
      _
    $region47: #{tpu_custom_call.1} parent=1 // pred_check_branch
      %227 = sbr.rel (0) target = $region49
    $region48: #{tpu_custom_call.1} parent=1 // pred_region
      %228 = dma.done [#allocation4], 128
    $region49: #{tpu_custom_call.1} parent=1 // pred_fallthru
      _
    %229 = vsyncpa [#allocation3], 1
    %230 = vsyncpa [#allocation6], 1
    %231 = vsyncpa [#allocation9], 1
    %232 = vsyncpa [#allocation4], 1

</llo_original>
